<compile_context>
chip_gen: v7x
topology: tpu7x:2x2x1
jax: 0.10.0
libtpu: 0.0.40
codegen_flags: <defaults>
</compile_context>

<pallas_src>
import functools
import math

import jax
import jax.numpy as jnp
import numpy as np
from jax import lax
from jax.experimental import pallas as pl
from jax.experimental.pallas import tpu as pltpu

_NEG = -1e30   # large negative instead of -inf (safe f32 arithmetic, matches reference)
_ROWS = 8      # sublane chunk size for the DP loops


def _monotonic_align_kernel(x_lens_ref, y_lens_ref,   # scalar prefetch (SMEM)
                            x_ref, yt_ref,            # inputs  (VMEM tiles)
                            out_ref,                  # output  (VMEM tile, (1, T_yp, T_xp))
                            work_ref,                 # scratch (T_yp, T_xp): prior -> dir
                            *, const):
    b = pl.program_id(0)
    x_len = x_lens_ref[b]
    y_len = y_lens_ref[b]

    T_xp = x_ref.shape[2]
    T_yp = yt_ref.shape[1]
    n_chunks = T_yp // _ROWS

    xb = x_ref[0].astype(jnp.float32)      # (C, T_xp)
    ybt = yt_ref[0].astype(jnp.float32)    # (T_yp, C)  (pre-transposed in the wrapper)

    # ---- log prior:  sum_c y*x - 0.5*sum_c y^2 - 0.5*sum_c x^2 + const ------------
    cross = jnp.dot(ybt, xb, preferred_element_type=jnp.float32)   # (T_yp, T_xp), MXU
    y2 = jnp.sum(ybt * ybt, axis=1, keepdims=True)                 # (T_yp, 1)
    x2 = jnp.sum(xb * xb, axis=0, keepdims=True)                   # (1, T_xp)
    log_prior = cross - 0.5 * y2 - 0.5 * x2 + const

    ty_idx = lax.broadcasted_iota(jnp.int32, (T_yp, T_xp), 0)
    tx_idx = lax.broadcasted_iota(jnp.int32, (T_yp, T_xp), 1)
    mask = ((tx_idx < x_len) & (ty_idx < y_len)).astype(jnp.float32)
    work_ref[...] = log_prior * mask       # scratch now holds the masked value matrix

    # ---- hoisted loop invariants ---------------------------------------------------
    lane = lax.broadcasted_iota(jnp.int32, (1, T_xp), 1)
    is_lane0 = lane == 0
    x_valid = lane < x_len
    neg_row = jnp.full((1, T_xp), _NEG, jnp.float32)
    ones_row = jnp.ones((1, T_xp), jnp.float32)
    zeros_row = jnp.zeros((1, T_xp), jnp.float32)
    row_ids = lax.broadcasted_iota(jnp.int32, (_ROWS, T_xp), 0)
    row_masks = [row_ids == r for r in range(_ROWS)]

    # ---- forward DP over frames, 8 frames per aligned scratch access ---------------
    def fwd_chunk(cj, v):                                   # v: (1, T_xp) running best score
        j0 = pl.multiple_of(cj * _ROWS, _ROWS)
        val_rows = work_ref[pl.ds(j0, _ROWS), :]            # (8, T_xp) masked log-prior
        dirs = jnp.zeros((_ROWS, T_xp), jnp.float32)
        for r in range(_ROWS):
            j = j0 + r
            v0 = pltpu.roll(v, shift=1, axis=1)             # v0[x] = v[x-1]  (XLU, no MXU)
            v0 = jnp.where(is_lane0, neg_row, v0)
            stay = v >= v0                                  # True -> stay, False -> diagonal
            v_max = jnp.where(stay, v, v0)
            dir_row = jnp.where(x_valid & (j < y_len),
                                stay.astype(jnp.float32), ones_row)
            dirs = jnp.where(row_masks[r], dir_row, dirs)   # assemble chunk in vregs
            v = jnp.where(lane <= j, v_max + val_rows[r:r + 1, :], neg_row)
        work_ref[pl.ds(j0, _ROWS), :] = dirs                # aligned (8, T_xp) store
        return v

    lax.fori_loop(0, n_chunks, fwd_chunk, jnp.zeros((1, T_xp), jnp.float32))

    # ---- backtrack: one-hot carry, path chunks written straight to the output ------
    def bwd_chunk(ct, onehot):                              # onehot: (1, T_xp) f32
        cj = n_chunks - 1 - ct
        j0 = pl.multiple_of(cj * _ROWS, _ROWS)
        dir_rows = work_ref[pl.ds(j0, _ROWS), :]            # (8, T_xp) direction bits
        path_chunk = jnp.zeros((_ROWS, T_xp), jnp.float32)
        for r in range(_ROWS - 1, -1, -1):
            j = j0 + r
            dir_row = dir_rows[r:r + 1, :]
            path_row = jnp.where(j < y_len, onehot, zeros_row)
            path_chunk = jnp.where(row_masks[r], path_row, path_chunk)
            move = onehot * (ones_row - dir_row)            # dir==0 -> step to x-1
            onehot = onehot * dir_row + pltpu.roll(move, shift=T_xp - 1, axis=1)
        out_ref[0, pl.ds(j0, _ROWS), :] = path_chunk.astype(out_ref.dtype)
        return onehot

    onehot0 = (lane == x_len - 1).astype(jnp.float32)
    lax.fori_loop(0, n_chunks, bwd_chunk, onehot0)


def monotonic_align(x, x_lens, y, y_lens, ndim):
    """x: (B, C, T_x), y: (B, C, T_y), lens: (B,) int -> attn path (B, T_x, T_y)."""
    B, C, T_x = x.shape
    T_y = y.shape[2]
    const = -0.5 * math.log(2.0 * math.pi) * ndim

    # Pad text axis to a lane multiple (clean 128-lane rolls, dense vregs) and the frame
    # axis to a sublane multiple (aligned 8-row scratch chunks).  Padding is masked out
    # by x_lens / y_lens inside the kernel and sliced off below.
    T_xp = ((T_x + 127) // 128) * 128
    T_yp = ((T_y + _ROWS - 1) // _ROWS) * _ROWS
    if T_xp != T_x:
        x = jnp.pad(x, ((0, 0), (0, 0), (0, T_xp - T_x)))
    if T_yp != T_y:
        y = jnp.pad(y, ((0, 0), (0, 0), (0, T_yp - T_y)))
    y_t = jnp.transpose(y, (0, 2, 1))                       # (B, T_yp, C) — cheap XLA op

    kernel = functools.partial(_monotonic_align_kernel, const=const)

    # Explicit VMEM budget: 1x f32 scratch + double-buffered in/out blocks + headroom.
    bpe = np.dtype(x.dtype).itemsize
    c_sub = ((C + 7) // 8) * 8
    c_lane = ((C + 127) // 128) * 128
    vmem_bytes = 4 * T_yp * T_xp                            # scratch (f32)
    vmem_bytes += 2 * bpe * T_yp * T_xp                     # output block (double-buffered)
    vmem_bytes += 2 * bpe * c_sub * T_xp                    # x block (double-buffered)
    vmem_bytes += 2 * bpe * T_yp * c_lane                   # y block (lane-padded)
    vmem_limit = int(min(max(vmem_bytes + (8 << 20), 32 << 20), 64 << 20))

    path = pl.pallas_call(
        kernel,
        out_shape=jax.ShapeDtypeStruct((B, T_yp, T_xp), x.dtype),
        grid_spec=pltpu.PrefetchScalarGridSpec(
            num_scalar_prefetch=2,
            grid=(B,),
            in_specs=[
                pl.BlockSpec((1, C, T_xp), lambda b, *_: (b, 0, 0)),
                pl.BlockSpec((1, T_yp, C), lambda b, *_: (b, 0, 0)),
            ],
            out_specs=pl.BlockSpec((1, T_yp, T_xp), lambda b, *_: (b, 0, 0)),
            scratch_shapes=[
                pltpu.VMEM((T_yp, T_xp), jnp.float32),      # value -> direction (in place)
            ],
        ),
        compiler_params=pltpu.CompilerParams(
            dimension_semantics=("parallel",),              # independent batches (2 TCs on v7x)
            vmem_limit_bytes=vmem_limit,
        ),
    )(x_lens.astype(jnp.int32), y_lens.astype(jnp.int32), x, y_t)

    # Kernel output is (B, T_y, T_x); drop padding and return PyTorch layout (B, T_x, T_y).
    return jnp.transpose(path[:, :T_y, :T_x], (0, 2, 1))


# ---------------- pure-numpy reference (mirrors the PyTorch forward) ----------------
def _ref_maximum_path(value, mask, max_neg_val=_NEG):
    value = (value * mask).astype(np.float32)
    b, t_x, t_y = value.shape
    direction = np.zeros(value.shape, dtype=np.int64)
    v = np.zeros((b, t_x), dtype=np.float32)
    x_range = np.arange(t_x, dtype=np.float32).reshape(1, -1)
    for j in range(t_y):
        v0 = np.pad(v, [[0, 0], [1, 0]], mode="constant",
                    constant_values=max_neg_val)[:, :-1]
        v1 = v
        max_mask = v1 >= v0
        v_max = np.where(max_mask, v1, v0)
        direction[:, :, j] = max_mask
        index_mask = x_range <= j
        v = np.where(index_mask, v_max + value[:, :, j], max_neg_val)
    direction = np.where(mask, direction, 1)
    path = np.zeros(value.shape, dtype=np.float32)
    index = mask[:, :, 0].sum(1).astype(np.int64) - 1
    index_range = np.arange(b)
    for j in reversed(range(t_y)):
        path[index_range, index, j] = 1
        index = index + direction[index_range, index, j] - 1
    return path * mask


def _ref_forward(x, x_lens, y, y_lens, ndim):
    B, C, T_x = x.shape
    T_y = y.shape[2]
    x_mask = (np.arange(T_x)[None, :] < x_lens[:, None]).astype(np.float32)
    y_mask = (np.arange(T_y)[None, :] < y_lens[:, None]).astype(np.float32)
    attn_mask = x_mask[:, :, None] * y_mask[:, None, :]
    const = -0.5 * math.log(2.0 * math.pi) * ndim
    factor = -0.5 * np.ones_like(x)
    y_square = np.matmul(np.transpose(factor, (0, 2, 1)), y ** 2)
    y_mu_double = np.matmul(np.transpose(2.0 * factor * x, (0, 2, 1)), y)
    mu_square = np.sum(factor * x ** 2, axis=1)[:, :, None]
    log_prior = y_square - y_mu_double + mu_square + const
    return _ref_maximum_path(log_prior.astype(np.float32), attn_mask)


if __name__ == "__main__":
    B, C, T_x, T_y = 2, 4, 8, 16
    ndim = C

    key = jax.random.PRNGKey(0)
    kx, ky = jax.random.split(key)
    x = jax.random.normal(kx, (B, C, T_x), dtype=jnp.float32)
    y = jax.random.normal(ky, (B, C, T_y), dtype=jnp.float32)
    x_lens = jnp.array([8, 5], dtype=jnp.int32)
    y_lens = jnp.array([16, 11], dtype=jnp.int32)

    attn = monotonic_align(x, x_lens, y, y_lens, ndim)
    attn = jax.block_until_ready(attn)

    ref = _ref_forward(np.asarray(x), np.asarray(x_lens),
                       np.asarray(y), np.asarray(y_lens), ndim)

    assert attn.shape == (B, T_x, T_y), attn.shape
    np.testing.assert_allclose(np.asarray(attn), ref, atol=1e-6)
    print("KERNEL_OK")
</pallas_src>

<mosaic_0001>
module attributes {stable_mosaic.version = 11 : i64} {
  func.func @_monotonic_align_kernel(%arg0: i32, %arg1: memref<2xi32, #tpu.memory_space<smem>>, %arg2: memref<2xi32, #tpu.memory_space<smem>>, %arg3: memref<1x4x128xf32, #tpu.memory_space<vmem>>, %arg4: memref<1x16x4xf32, #tpu.memory_space<vmem>>, %arg5: memref<1x16x128xf32, #tpu.memory_space<vmem>>, %arg6: memref<16x128xf32, #tpu.memory_space<vmem>>) attributes {dimension_semantics = [#tpu.dimension_semantics<parallel>], iteration_bounds = array<i64: 2>, scalar_prefetch = 2 : i64, scratch_operands = 1 : i64, tpu.core_type = #tpu.core_type<tc>, window_params = [{transform_indices = @transform_0, window_bounds = array<i64: 1, 4, 128>}, {transform_indices = @transform_1, window_bounds = array<i64: 1, 16, 4>}, {transform_indices = @transform_2, window_bounds = array<i64: 1, 16, 128>}]} {
    %0 = arith.index_cast %arg0 : i32 to index
    %1 = memref.load %arg1[%0] : memref<2xi32, #tpu.memory_space<smem>>
    %2 = arith.index_cast %arg0 : i32 to index
    %3 = memref.load %arg2[%2] : memref<2xi32, #tpu.memory_space<smem>>
    %c0 = arith.constant 0 : index
    %c0_0 = arith.constant 0 : index
    %c0_1 = arith.constant 0 : index
    %4 = vector.load %arg3[%c0, %c0_0, %c0_1] : memref<1x4x128xf32, #tpu.memory_space<vmem>>, vector<1x4x128xf32>
    %5 = vector.shape_cast %4 : vector<1x4x128xf32> to vector<4x128xf32>
    %c0_2 = arith.constant 0 : index
    %c0_3 = arith.constant 0 : index
    %c0_4 = arith.constant 0 : index
    %6 = vector.load %arg4[%c0_2, %c0_3, %c0_4] : memref<1x16x4xf32, #tpu.memory_space<vmem>>, vector<1x16x4xf32>
    %7 = vector.shape_cast %6 : vector<1x16x4xf32> to vector<16x4xf32>
    %cst = arith.constant dense<0.000000e+00> : vector<16x128xf32>
    %8 = tpu.matmul %7, %5, %cst {dimension_numbers = #tpu.dot_dimension_numbers<[1], [0], [0], [1], [0, 0, 1, 1], [], []>} : vector<16x4xf32>, vector<4x128xf32>, vector<16x128xf32> -> vector<16x128xf32>
    %9 = arith.mulf %7, %7 : vector<16x4xf32>
    %cst_5 = arith.constant dense<0.000000e+00> : vector<16xf32>
    %10 = vector.multi_reduction <add>, %9, %cst_5 [1] : vector<16x4xf32> to vector<16xf32>
    %11 = vector.shape_cast %10 : vector<16xf32> to vector<16x1xf32>
    %12 = arith.mulf %5, %5 : vector<4x128xf32>
    %cst_6 = arith.constant dense<0.000000e+00> : vector<128xf32>
    %13 = vector.multi_reduction <add>, %12, %cst_6 [0] : vector<4x128xf32> to vector<128xf32>
    %14 = vector.shape_cast %13 : vector<128xf32> to vector<1x128xf32>
    %cst_7 = arith.constant 5.000000e-01 : f32
    %15 = vector.broadcast %cst_7 : f32 to vector<16x1xf32>
    %16 = arith.mulf %15, %11 : vector<16x1xf32>
    %17 = vector.broadcast %16 : vector<16x1xf32> to vector<16x128xf32>
    %18 = arith.subf %8, %17 : vector<16x128xf32>
    %cst_8 = arith.constant 5.000000e-01 : f32
    %19 = vector.broadcast %cst_8 : f32 to vector<1x128xf32>
    %20 = arith.mulf %19, %14 : vector<1x128xf32>
    %21 = vector.broadcast %20 : vector<1x128xf32> to vector<16x128xf32>
    %22 = arith.subf %18, %21 : vector<16x128xf32>
    %cst_9 = arith.constant -3.67575407 : f32
    %23 = vector.broadcast %cst_9 : f32 to vector<16x128xf32>
    %24 = arith.addf %22, %23 : vector<16x128xf32>
    %25 = tpu.iota {dimensions = array<i32: 0>} : vector<16x128xi32>
    %26 = tpu.iota {dimensions = array<i32: 1>} : vector<16x128xi32>
    %27 = vector.broadcast %1 : i32 to vector<16x128xi32>
    %28 = arith.cmpi slt, %26, %27 : vector<16x128xi32>
    %29 = vector.broadcast %3 : i32 to vector<16x128xi32>
    %30 = arith.cmpi slt, %25, %29 : vector<16x128xi32>
    %31 = arith.andi %28, %30 : vector<16x128xi1>
    %32 = arith.extui %31 : vector<16x128xi1> to vector<16x128xi32>
    %33 = arith.sitofp %32 : vector<16x128xi32> to vector<16x128xf32>
    %34 = arith.mulf %24, %33 : vector<16x128xf32>
    %c0_10 = arith.constant 0 : index
    %c0_11 = arith.constant 0 : index
    %35 = vector.load %arg6[%c0_10, %c0_11] : memref<16x128xf32, #tpu.memory_space<vmem>>, vector<16x128xf32>
    tpu.vector_store %arg6[%c0_10, %c0_11], %34 {strides = array<i32>} : memref<16x128xf32, #tpu.memory_space<vmem>>, vector<16x128xf32>,
    %36 = tpu.iota {dimensions = array<i32: 1>} : vector<1x128xi32>
    %c0_i32 = arith.constant 0 : i32
    %37 = vector.broadcast %c0_i32 : i32 to vector<1x128xi32>
    %38 = arith.cmpi eq, %36, %37 : vector<1x128xi32>
    %39 = vector.broadcast %1 : i32 to vector<1x128xi32>
    %40 = arith.cmpi slt, %36, %39 : vector<1x128xi32>
    %cst_12 = arith.constant -1.000000e+30 : f32
    %41 = vector.broadcast %cst_12 : f32 to vector<1x128xf32>
    %cst_13 = arith.constant 1.000000e+00 : f32
    %42 = vector.broadcast %cst_13 : f32 to vector<1x128xf32>
    %cst_14 = arith.constant 0.000000e+00 : f32
    %43 = vector.broadcast %cst_14 : f32 to vector<1x128xf32>
    %44 = tpu.iota {dimensions = array<i32: 0>} : vector<8x128xi32>
    %c0_i32_15 = arith.constant 0 : i32
    %45 = vector.broadcast %c0_i32_15 : i32 to vector<8x128xi32>
    %46 = arith.cmpi eq, %44, %45 : vector<8x128xi32>
    %c1_i32 = arith.constant 1 : i32
    %47 = vector.broadcast %c1_i32 : i32 to vector<8x128xi32>
    %48 = arith.cmpi eq, %44, %47 : vector<8x128xi32>
    %c2_i32 = arith.constant 2 : i32
    %49 = vector.broadcast %c2_i32 : i32 to vector<8x128xi32>
    %50 = arith.cmpi eq, %44, %49 : vector<8x128xi32>
    %c3_i32 = arith.constant 3 : i32
    %51 = vector.broadcast %c3_i32 : i32 to vector<8x128xi32>
    %52 = arith.cmpi eq, %44, %51 : vector<8x128xi32>
    %c4_i32 = arith.constant 4 : i32
    %53 = vector.broadcast %c4_i32 : i32 to vector<8x128xi32>
    %54 = arith.cmpi eq, %44, %53 : vector<8x128xi32>
    %c5_i32 = arith.constant 5 : i32
    %55 = vector.broadcast %c5_i32 : i32 to vector<8x128xi32>
    %56 = arith.cmpi eq, %44, %55 : vector<8x128xi32>
    %c6_i32 = arith.constant 6 : i32
    %57 = vector.broadcast %c6_i32 : i32 to vector<8x128xi32>
    %58 = arith.cmpi eq, %44, %57 : vector<8x128xi32>
    %c7_i32 = arith.constant 7 : i32
    %59 = vector.broadcast %c7_i32 : i32 to vector<8x128xi32>
    %60 = arith.cmpi eq, %44, %59 : vector<8x128xi32>
    %cst_16 = arith.constant 0.000000e+00 : f32
    %61 = vector.broadcast %cst_16 : f32 to vector<1x128xf32>
    %c0_i32_17 = arith.constant 0 : i32
    %c2_i32_18 = arith.constant 2 : i32
    %62 = arith.addi %c0_i32_17, %c2_i32_18 : i32
    %c1_i32_19 = arith.constant 1 : i32
    %63 = scf.for %arg7 = %c0_i32_17 to %62 step %c1_i32_19 iter_args(%arg8 = %61) -> (vector<1x128xf32>)  : i32 {
      %c8_i32 = arith.constant 8 : i32
      %71 = arith.muli %arg7, %c8_i32 : i32
      %72 = tpu.assume_multiple %71, 8 : i32
      %73 = arith.index_cast %72 : i32 to index
      %c0_26 = arith.constant 0 : index
      %74 = vector.load %arg6[%73, %c0_26] : memref<16x128xf32, #tpu.memory_space<vmem>>, vector<8x128xf32>
      %cst_27 = arith.constant 0.000000e+00 : f32
      %75 = vector.broadcast %cst_27 : f32 to vector<8x128xf32>
      %c0_i32_28 = arith.constant 0 : i32
      %76 = arith.addi %72, %c0_i32_28 : i32
      %c1_i32_29 = arith.constant 1 : i32
      %77 = tpu.dynamic_rotate %arg8 by %c1_i32_29 dim 1 : vector<1x128xf32>, i32 -> vector<1x128xf32>
      %78 = arith.select %38, %41, %77 : vector<1x128xi1>, vector<1x128xf32>
      %79 = arith.cmpf oge, %arg8, %78 : vector<1x128xf32>
      %80 = arith.select %79, %arg8, %78 : vector<1x128xi1>, vector<1x128xf32>
      %81 = arith.cmpi slt, %76, %3 : i32
      %82 = vector.broadcast %81 : i1 to vector<1x128xi1>
      %83 = arith.andi %40, %82 : vector<1x128xi1>
      %84 = arith.extui %79 : vector<1x128xi1> to vector<1x128xi32>
      %85 = arith.sitofp %84 : vector<1x128xi32> to vector<1x128xf32>
      %86 = arith.select %83, %85, %42 : vector<1x128xi1>, vector<1x128xf32>
      %87 = vector.shape_cast %86 : vector<1x128xf32> to vector<1x128xf32>
      %88 = vector.broadcast %87 : vector<1x128xf32> to vector<8x128xf32>
      %89 = arith.select %46, %88, %75 : vector<8x128xi1>, vector<8x128xf32>
      %90 = vector.broadcast %76 : i32 to vector<1x128xi32>
      %91 = arith.cmpi sle, %36, %90 : vector<1x128xi32>
      %92 = vector.extract_strided_slice %74 {offsets = [0, 0], sizes = [1, 128], strides = [1, 1]} : vector<8x128xf32> to vector<1x128xf32>
      %93 = arith.addf %80, %92 : vector<1x128xf32>
      %94 = arith.select %91, %93, %41 : vector<1x128xi1>, vector<1x128xf32>
      %c1_i32_30 = arith.constant 1 : i32
      %95 = arith.addi %72, %c1_i32_30 : i32
      %c1_i32_31 = arith.constant 1 : i32
      %96 = tpu.dynamic_rotate %94 by %c1_i32_31 dim 1 : vector<1x128xf32>, i32 -> vector<1x128xf32>
      %97 = arith.select %38, %41, %96 : vector<1x128xi1>, vector<1x128xf32>
      %98 = arith.cmpf oge, %94, %97 : vector<1x128xf32>
      %99 = arith.select %98, %94, %97 : vector<1x128xi1>, vector<1x128xf32>
      %100 = arith.cmpi slt, %95, %3 : i32
      %101 = vector.broadcast %100 : i1 to vector<1x128xi1>
      %102 = arith.andi %40, %101 : vector<1x128xi1>
      %103 = arith.extui %98 : vector<1x128xi1> to vector<1x128xi32>
      %104 = arith.sitofp %103 : vector<1x128xi32> to vector<1x128xf32>
      %105 = arith.select %102, %104, %42 : vector<1x128xi1>, vector<1x128xf32>
      %106 = vector.shape_cast %105 : vector<1x128xf32> to vector<1x128xf32>
      %107 = vector.broadcast %106 : vector<1x128xf32> to vector<8x128xf32>
      %108 = arith.select %48, %107, %89 : vector<8x128xi1>, vector<8x128xf32>
      %109 = vector.broadcast %95 : i32 to vector<1x128xi32>
      %110 = arith.cmpi sle, %36, %109 : vector<1x128xi32>
      %111 = vector.extract_strided_slice %74 {offsets = [1, 0], sizes = [1, 128], strides = [1, 1]} : vector<8x128xf32> to vector<1x128xf32>
      %112 = arith.addf %99, %111 : vector<1x128xf32>
      %113 = arith.select %110, %112, %41 : vector<1x128xi1>, vector<1x128xf32>
      %c2_i32_32 = arith.constant 2 : i32
      %114 = arith.addi %72, %c2_i32_32 : i32
      %c1_i32_33 = arith.constant 1 : i32
      %115 = tpu.dynamic_rotate %113 by %c1_i32_33 dim 1 : vector<1x128xf32>, i32 -> vector<1x128xf32>
      %116 = arith.select %38, %41, %115 : vector<1x128xi1>, vector<1x128xf32>
      %117 = arith.cmpf oge, %113, %116 : vector<1x128xf32>
      %118 = arith.select %117, %113, %116 : vector<1x128xi1>, vector<1x128xf32>
      %119 = arith.cmpi slt, %114, %3 : i32
      %120 = vector.broadcast %119 : i1 to vector<1x128xi1>
      %121 = arith.andi %40, %120 : vector<1x128xi1>
      %122 = arith.extui %117 : vector<1x128xi1> to vector<1x128xi32>
      %123 = arith.sitofp %122 : vector<1x128xi32> to vector<1x128xf32>
      %124 = arith.select %121, %123, %42 : vector<1x128xi1>, vector<1x128xf32>
      %125 = vector.shape_cast %124 : vector<1x128xf32> to vector<1x128xf32>
      %126 = vector.broadcast %125 : vector<1x128xf32> to vector<8x128xf32>
      %127 = arith.select %50, %126, %108 : vector<8x128xi1>, vector<8x128xf32>
      %128 = vector.broadcast %114 : i32 to vector<1x128xi32>
      %129 = arith.cmpi sle, %36, %128 : vector<1x128xi32>
      %130 = vector.extract_strided_slice %74 {offsets = [2, 0], sizes = [1, 128], strides = [1, 1]} : vector<8x128xf32> to vector<1x128xf32>
      %131 = arith.addf %118, %130 : vector<1x128xf32>
      %132 = arith.select %129, %131, %41 : vector<1x128xi1>, vector<1x128xf32>
      %c3_i32_34 = arith.constant 3 : i32
      %133 = arith.addi %72, %c3_i32_34 : i32
      %c1_i32_35 = arith.constant 1 : i32
      %134 = tpu.dynamic_rotate %132 by %c1_i32_35 dim 1 : vector<1x128xf32>, i32 -> vector<1x128xf32>
      %135 = arith.select %38, %41, %134 : vector<1x128xi1>, vector<1x128xf32>
      %136 = arith.cmpf oge, %132, %135 : vector<1x128xf32>
      %137 = arith.select %136, %132, %135 : vector<1x128xi1>, vector<1x128xf32>
      %138 = arith.cmpi slt, %133, %3 : i32
      %139 = vector.broadcast %138 : i1 to vector<1x128xi1>
      %140 = arith.andi %40, %139 : vector<1x128xi1>
      %141 = arith.extui %136 : vector<1x128xi1> to vector<1x128xi32>
      %142 = arith.sitofp %141 : vector<1x128xi32> to vector<1x128xf32>
      %143 = arith.select %140, %142, %42 : vector<1x128xi1>, vector<1x128xf32>
      %144 = vector.shape_cast %143 : vector<1x128xf32> to vector<1x128xf32>
      %145 = vector.broadcast %144 : vector<1x128xf32> to vector<8x128xf32>
      %146 = arith.select %52, %145, %127 : vector<8x128xi1>, vector<8x128xf32>
      %147 = vector.broadcast %133 : i32 to vector<1x128xi32>
      %148 = arith.cmpi sle, %36, %147 : vector<1x128xi32>
      %149 = vector.extract_strided_slice %74 {offsets = [3, 0], sizes = [1, 128], strides = [1, 1]} : vector<8x128xf32> to vector<1x128xf32>
      %150 = arith.addf %137, %149 : vector<1x128xf32>
      %151 = arith.select %148, %150, %41 : vector<1x128xi1>, vector<1x128xf32>
      %c4_i32_36 = arith.constant 4 : i32
      %152 = arith.addi %72, %c4_i32_36 : i32
      %c1_i32_37 = arith.constant 1 : i32
      %153 = tpu.dynamic_rotate %151 by %c1_i32_37 dim 1 : vector<1x128xf32>, i32 -> vector<1x128xf32>
      %154 = arith.select %38, %41, %153 : vector<1x128xi1>, vector<1x128xf32>
      %155 = arith.cmpf oge, %151, %154 : vector<1x128xf32>
      %156 = arith.select %155, %151, %154 : vector<1x128xi1>, vector<1x128xf32>
      %157 = arith.cmpi slt, %152, %3 : i32
      %158 = vector.broadcast %157 : i1 to vector<1x128xi1>
      %159 = arith.andi %40, %158 : vector<1x128xi1>
      %160 = arith.extui %155 : vector<1x128xi1> to vector<1x128xi32>
      %161 = arith.sitofp %160 : vector<1x128xi32> to vector<1x128xf32>
      %162 = arith.select %159, %161, %42 : vector<1x128xi1>, vector<1x128xf32>
      %163 = vector.shape_cast %162 : vector<1x128xf32> to vector<1x128xf32>
      %164 = vector.broadcast %163 : vector<1x128xf32> to vector<8x128xf32>
      %165 = arith.select %54, %164, %146 : vector<8x128xi1>, vector<8x128xf32>
      %166 = vector.broadcast %152 : i32 to vector<1x128xi32>
      %167 = arith.cmpi sle, %36, %166 : vector<1x128xi32>
      %168 = vector.extract_strided_slice %74 {offsets = [4, 0], sizes = [1, 128], strides = [1, 1]} : vector<8x128xf32> to vector<1x128xf32>
      %169 = arith.addf %156, %168 : vector<1x128xf32>
      %170 = arith.select %167, %169, %41 : vector<1x128xi1>, vector<1x128xf32>
      %c5_i32_38 = arith.constant 5 : i32
      %171 = arith.addi %72, %c5_i32_38 : i32
      %c1_i32_39 = arith.constant 1 : i32
      %172 = tpu.dynamic_rotate %170 by %c1_i32_39 dim 1 : vector<1x128xf32>, i32 -> vector<1x128xf32>
      %173 = arith.select %38, %41, %172 : vector<1x128xi1>, vector<1x128xf32>
      %174 = arith.cmpf oge, %170, %173 : vector<1x128xf32>
      %175 = arith.select %174, %170, %173 : vector<1x128xi1>, vector<1x128xf32>
      %176 = arith.cmpi slt, %171, %3 : i32
      %177 = vector.broadcast %176 : i1 to vector<1x128xi1>
      %178 = arith.andi %40, %177 : vector<1x128xi1>
      %179 = arith.extui %174 : vector<1x128xi1> to vector<1x128xi32>
      %180 = arith.sitofp %179 : vector<1x128xi32> to vector<1x128xf32>
      %181 = arith.select %178, %180, %42 : vector<1x128xi1>, vector<1x128xf32>
      %182 = vector.shape_cast %181 : vector<1x128xf32> to vector<1x128xf32>
      %183 = vector.broadcast %182 : vector<1x128xf32> to vector<8x128xf32>
      %184 = arith.select %56, %183, %165 : vector<8x128xi1>, vector<8x128xf32>
      %185 = vector.broadcast %171 : i32 to vector<1x128xi32>
      %186 = arith.cmpi sle, %36, %185 : vector<1x128xi32>
      %187 = vector.extract_strided_slice %74 {offsets = [5, 0], sizes = [1, 128], strides = [1, 1]} : vector<8x128xf32> to vector<1x128xf32>
      %188 = arith.addf %175, %187 : vector<1x128xf32>
      %189 = arith.select %186, %188, %41 : vector<1x128xi1>, vector<1x128xf32>
      %c6_i32_40 = arith.constant 6 : i32
      %190 = arith.addi %72, %c6_i32_40 : i32
      %c1_i32_41 = arith.constant 1 : i32
      %191 = tpu.dynamic_rotate %189 by %c1_i32_41 dim 1 : vector<1x128xf32>, i32 -> vector<1x128xf32>
      %192 = arith.select %38, %41, %191 : vector<1x128xi1>, vector<1x128xf32>
      %193 = arith.cmpf oge, %189, %192 : vector<1x128xf32>
      %194 = arith.select %193, %189, %192 : vector<1x128xi1>, vector<1x128xf32>
      %195 = arith.cmpi slt, %190, %3 : i32
      %196 = vector.broadcast %195 : i1 to vector<1x128xi1>
      %197 = arith.andi %40, %196 : vector<1x128xi1>
      %198 = arith.extui %193 : vector<1x128xi1> to vector<1x128xi32>
      %199 = arith.sitofp %198 : vector<1x128xi32> to vector<1x128xf32>
      %200 = arith.select %197, %199, %42 : vector<1x128xi1>, vector<1x128xf32>
      %201 = vector.shape_cast %200 : vector<1x128xf32> to vector<1x128xf32>
      %202 = vector.broadcast %201 : vector<1x128xf32> to vector<8x128xf32>
      %203 = arith.select %58, %202, %184 : vector<8x128xi1>, vector<8x128xf32>
      %204 = vector.broadcast %190 : i32 to vector<1x128xi32>
      %205 = arith.cmpi sle, %36, %204 : vector<1x128xi32>
      %206 = vector.extract_strided_slice %74 {offsets = [6, 0], sizes = [1, 128], strides = [1, 1]} : vector<8x128xf32> to vector<1x128xf32>
      %207 = arith.addf %194, %206 : vector<1x128xf32>
      %208 = arith.select %205, %207, %41 : vector<1x128xi1>, vector<1x128xf32>
      %c7_i32_42 = arith.constant 7 : i32
      %209 = arith.addi %72, %c7_i32_42 : i32
      %c1_i32_43 = arith.constant 1 : i32
      %210 = tpu.dynamic_rotate %208 by %c1_i32_43 dim 1 : vector<1x128xf32>, i32 -> vector<1x128xf32>
      %211 = arith.select %38, %41, %210 : vector<1x128xi1>, vector<1x128xf32>
      %212 = arith.cmpf oge, %208, %211 : vector<1x128xf32>
      %213 = arith.select %212, %208, %211 : vector<1x128xi1>, vector<1x128xf32>
      %214 = arith.cmpi slt, %209, %3 : i32
      %215 = vector.broadcast %214 : i1 to vector<1x128xi1>
      %216 = arith.andi %40, %215 : vector<1x128xi1>
      %217 = arith.extui %212 : vector<1x128xi1> to vector<1x128xi32>
      %218 = arith.sitofp %217 : vector<1x128xi32> to vector<1x128xf32>
      %219 = arith.select %216, %218, %42 : vector<1x128xi1>, vector<1x128xf32>
      %220 = vector.shape_cast %219 : vector<1x128xf32> to vector<1x128xf32>
      %221 = vector.broadcast %220 : vector<1x128xf32> to vector<8x128xf32>
      %222 = arith.select %60, %221, %203 : vector<8x128xi1>, vector<8x128xf32>
      %223 = vector.broadcast %209 : i32 to vector<1x128xi32>
      %224 = arith.cmpi sle, %36, %223 : vector<1x128xi32>
      %225 = vector.extract_strided_slice %74 {offsets = [7, 0], sizes = [1, 128], strides = [1, 1]} : vector<8x128xf32> to vector<1x128xf32>
      %226 = arith.addf %213, %225 : vector<1x128xf32>
      %227 = arith.select %224, %226, %41 : vector<1x128xi1>, vector<1x128xf32>
      %228 = arith.index_cast %72 : i32 to index
      %c0_44 = arith.constant 0 : index
      %229 = vector.load %arg6[%228, %c0_44] : memref<16x128xf32, #tpu.memory_space<vmem>>, vector<8x128xf32>
      tpu.vector_store %arg6[%228, %c0_44], %222 {strides = array<i32>} : memref<16x128xf32, #tpu.memory_space<vmem>>, vector<8x128xf32>,
      scf.yield %227 : vector<1x128xf32>
    }
    %c2_i32_20 = arith.constant 2 : i32
    %c1_i32_21 = arith.constant 1 : i32
    %64 = arith.subi %1, %c1_i32_21 : i32
    %65 = vector.broadcast %64 : i32 to vector<1x128xi32>
    %66 = arith.cmpi eq, %36, %65 : vector<1x128xi32>
    %67 = arith.extui %66 : vector<1x128xi1> to vector<1x128xi32>
    %68 = arith.sitofp %67 : vector<1x128xi32> to vector<1x128xf32>
    %c0_i32_22 = arith.constant 0 : i32
    %c2_i32_23 = arith.constant 2 : i32
    %69 = arith.addi %c0_i32_22, %c2_i32_23 : i32
    %c1_i32_24 = arith.constant 1 : i32
    %70 = scf.for %arg7 = %c0_i32_22 to %69 step %c1_i32_24 iter_args(%arg8 = %68) -> (vector<1x128xf32>)  : i32 {
      %c1_i32_26 = arith.constant 1 : i32
      %71 = arith.subi %c1_i32_26, %arg7 : i32
      %c8_i32 = arith.constant 8 : i32
      %72 = arith.muli %71, %c8_i32 : i32
      %73 = tpu.assume_multiple %72, 8 : i32
      %74 = arith.index_cast %73 : i32 to index
      %c0_27 = arith.constant 0 : index
      %75 = vector.load %arg6[%74, %c0_27] : memref<16x128xf32, #tpu.memory_space<vmem>>, vector<8x128xf32>
      %cst_28 = arith.constant 0.000000e+00 : f32
      %76 = vector.broadcast %cst_28 : f32 to vector<8x128xf32>
      %c7_i32_29 = arith.constant 7 : i32
      %77 = arith.addi %73, %c7_i32_29 : i32
      %78 = vector.extract_strided_slice %75 {offsets = [7, 0], sizes = [1, 128], strides = [1, 1]} : vector<8x128xf32> to vector<1x128xf32>
      %79 = arith.cmpi slt, %77, %3 : i32
      %80 = arith.select %79, %arg8, %43 : vector<1x128xf32>
      %81 = vector.shape_cast %80 : vector<1x128xf32> to vector<1x128xf32>
      %82 = vector.broadcast %81 : vector<1x128xf32> to vector<8x128xf32>
      %83 = arith.select %60, %82, %76 : vector<8x128xi1>, vector<8x128xf32>
      %84 = arith.subf %42, %78 : vector<1x128xf32>
      %85 = arith.mulf %arg8, %84 : vector<1x128xf32>
      %86 = arith.mulf %arg8, %78 : vector<1x128xf32>
      %c127_i32 = arith.constant 127 : i32
      %87 = tpu.dynamic_rotate %85 by %c127_i32 dim 1 : vector<1x128xf32>, i32 -> vector<1x128xf32>
      %88 = arith.addf %86, %87 : vector<1x128xf32>
      %c6_i32_30 = arith.constant 6 : i32
      %89 = arith.addi %73, %c6_i32_30 : i32
      %90 = vector.extract_strided_slice %75 {offsets = [6, 0], sizes = [1, 128], strides = [1, 1]} : vector<8x128xf32> to vector<1x128xf32>
      %91 = arith.cmpi slt, %89, %3 : i32
      %92 = arith.select %91, %88, %43 : vector<1x128xf32>
      %93 = vector.shape_cast %92 : vector<1x128xf32> to vector<1x128xf32>
      %94 = vector.broadcast %93 : vector<1x128xf32> to vector<8x128xf32>
      %95 = arith.select %58, %94, %83 : vector<8x128xi1>, vector<8x128xf32>
      %96 = arith.subf %42, %90 : vector<1x128xf32>
      %97 = arith.mulf %88, %96 : vector<1x128xf32>
      %98 = arith.mulf %88, %90 : vector<1x128xf32>
      %c127_i32_31 = arith.constant 127 : i32
      %99 = tpu.dynamic_rotate %97 by %c127_i32_31 dim 1 : vector<1x128xf32>, i32 -> vector<1x128xf32>
      %100 = arith.addf %98, %99 : vector<1x128xf32>
      %c5_i32_32 = arith.constant 5 : i32
      %101 = arith.addi %73, %c5_i32_32 : i32
      %102 = vector.extract_strided_slice %75 {offsets = [5, 0], sizes = [1, 128], strides = [1, 1]} : vector<8x128xf32> to vector<1x128xf32>
      %103 = arith.cmpi slt, %101, %3 : i32
      %104 = arith.select %103, %100, %43 : vector<1x128xf32>
      %105 = vector.shape_cast %104 : vector<1x128xf32> to vector<1x128xf32>
      %106 = vector.broadcast %105 : vector<1x128xf32> to vector<8x128xf32>
      %107 = arith.select %56, %106, %95 : vector<8x128xi1>, vector<8x128xf32>
      %108 = arith.subf %42, %102 : vector<1x128xf32>
      %109 = arith.mulf %100, %108 : vector<1x128xf32>
      %110 = arith.mulf %100, %102 : vector<1x128xf32>
      %c127_i32_33 = arith.constant 127 : i32
      %111 = tpu.dynamic_rotate %109 by %c127_i32_33 dim 1 : vector<1x128xf32>, i32 -> vector<1x128xf32>
      %112 = arith.addf %110, %111 : vector<1x128xf32>
      %c4_i32_34 = arith.constant 4 : i32
      %113 = arith.addi %73, %c4_i32_34 : i32
      %114 = vector.extract_strided_slice %75 {offsets = [4, 0], sizes = [1, 128], strides = [1, 1]} : vector<8x128xf32> to vector<1x128xf32>
      %115 = arith.cmpi slt, %113, %3 : i32
      %116 = arith.select %115, %112, %43 : vector<1x128xf32>
      %117 = vector.shape_cast %116 : vector<1x128xf32> to vector<1x128xf32>
      %118 = vector.broadcast %117 : vector<1x128xf32> to vector<8x128xf32>
      %119 = arith.select %54, %118, %107 : vector<8x128xi1>, vector<8x128xf32>
      %120 = arith.subf %42, %114 : vector<1x128xf32>
      %121 = arith.mulf %112, %120 : vector<1x128xf32>
      %122 = arith.mulf %112, %114 : vector<1x128xf32>
      %c127_i32_35 = arith.constant 127 : i32
      %123 = tpu.dynamic_rotate %121 by %c127_i32_35 dim 1 : vector<1x128xf32>, i32 -> vector<1x128xf32>
      %124 = arith.addf %122, %123 : vector<1x128xf32>
      %c3_i32_36 = arith.constant 3 : i32
      %125 = arith.addi %73, %c3_i32_36 : i32
      %126 = vector.extract_strided_slice %75 {offsets = [3, 0], sizes = [1, 128], strides = [1, 1]} : vector<8x128xf32> to vector<1x128xf32>
      %127 = arith.cmpi slt, %125, %3 : i32
      %128 = arith.select %127, %124, %43 : vector<1x128xf32>
      %129 = vector.shape_cast %128 : vector<1x128xf32> to vector<1x128xf32>
      %130 = vector.broadcast %129 : vector<1x128xf32> to vector<8x128xf32>
      %131 = arith.select %52, %130, %119 : vector<8x128xi1>, vector<8x128xf32>
      %132 = arith.subf %42, %126 : vector<1x128xf32>
      %133 = arith.mulf %124, %132 : vector<1x128xf32>
      %134 = arith.mulf %124, %126 : vector<1x128xf32>
      %c127_i32_37 = arith.constant 127 : i32
      %135 = tpu.dynamic_rotate %133 by %c127_i32_37 dim 1 : vector<1x128xf32>, i32 -> vector<1x128xf32>
      %136 = arith.addf %134, %135 : vector<1x128xf32>
      %c2_i32_38 = arith.constant 2 : i32
      %137 = arith.addi %73, %c2_i32_38 : i32
      %138 = vector.extract_strided_slice %75 {offsets = [2, 0], sizes = [1, 128], strides = [1, 1]} : vector<8x128xf32> to vector<1x128xf32>
      %139 = arith.cmpi slt, %137, %3 : i32
      %140 = arith.select %139, %136, %43 : vector<1x128xf32>
      %141 = vector.shape_cast %140 : vector<1x128xf32> to vector<1x128xf32>
      %142 = vector.broadcast %141 : vector<1x128xf32> to vector<8x128xf32>
      %143 = arith.select %50, %142, %131 : vector<8x128xi1>, vector<8x128xf32>
      %144 = arith.subf %42, %138 : vector<1x128xf32>
      %145 = arith.mulf %136, %144 : vector<1x128xf32>
      %146 = arith.mulf %136, %138 : vector<1x128xf32>
      %c127_i32_39 = arith.constant 127 : i32
      %147 = tpu.dynamic_rotate %145 by %c127_i32_39 dim 1 : vector<1x128xf32>, i32 -> vector<1x128xf32>
      %148 = arith.addf %146, %147 : vector<1x128xf32>
      %c1_i32_40 = arith.constant 1 : i32
      %149 = arith.addi %73, %c1_i32_40 : i32
      %150 = vector.extract_strided_slice %75 {offsets = [1, 0], sizes = [1, 128], strides = [1, 1]} : vector<8x128xf32> to vector<1x128xf32>
      %151 = arith.cmpi slt, %149, %3 : i32
      %152 = arith.select %151, %148, %43 : vector<1x128xf32>
      %153 = vector.shape_cast %152 : vector<1x128xf32> to vector<1x128xf32>
      %154 = vector.broadcast %153 : vector<1x128xf32> to vector<8x128xf32>
      %155 = arith.select %48, %154, %143 : vector<8x128xi1>, vector<8x128xf32>
      %156 = arith.subf %42, %150 : vector<1x128xf32>
      %157 = arith.mulf %148, %156 : vector<1x128xf32>
      %158 = arith.mulf %148, %150 : vector<1x128xf32>
      %c127_i32_41 = arith.constant 127 : i32
      %159 = tpu.dynamic_rotate %157 by %c127_i32_41 dim 1 : vector<1x128xf32>, i32 -> vector<1x128xf32>
      %160 = arith.addf %158, %159 : vector<1x128xf32>
      %c0_i32_42 = arith.constant 0 : i32
      %161 = arith.addi %73, %c0_i32_42 : i32
      %162 = vector.extract_strided_slice %75 {offsets = [0, 0], sizes = [1, 128], strides = [1, 1]} : vector<8x128xf32> to vector<1x128xf32>
      %163 = arith.cmpi slt, %161, %3 : i32
      %164 = arith.select %163, %160, %43 : vector<1x128xf32>
      %165 = vector.shape_cast %164 : vector<1x128xf32> to vector<1x128xf32>
      %166 = vector.broadcast %165 : vector<1x128xf32> to vector<8x128xf32>
      %167 = arith.select %46, %166, %155 : vector<8x128xi1>, vector<8x128xf32>
      %168 = arith.subf %42, %162 : vector<1x128xf32>
      %169 = arith.mulf %160, %168 : vector<1x128xf32>
      %170 = arith.mulf %160, %162 : vector<1x128xf32>
      %c127_i32_43 = arith.constant 127 : i32
      %171 = tpu.dynamic_rotate %169 by %c127_i32_43 dim 1 : vector<1x128xf32>, i32 -> vector<1x128xf32>
      %172 = arith.addf %170, %171 : vector<1x128xf32>
      %c0_44 = arith.constant 0 : index
      %173 = arith.index_cast %73 : i32 to index
      %c0_45 = arith.constant 0 : index
      %174 = vector.load %arg5[%c0_44, %173, %c0_45] : memref<1x16x128xf32, #tpu.memory_space<vmem>>, vector<1x8x128xf32>
      %175 = vector.shape_cast %174 : vector<1x8x128xf32> to vector<8x128xf32>
      %176 = vector.shape_cast %167 : vector<8x128xf32> to vector<1x8x128xf32>
      tpu.vector_store %arg5[%c0_44, %173, %c0_45], %176 {strides = array<i32>} : memref<1x16x128xf32, #tpu.memory_space<vmem>>, vector<1x8x128xf32>,
      scf.yield %172 : vector<1x128xf32>
    }
    %c2_i32_25 = arith.constant 2 : i32
    return
  }
  func.func @transform_0(%arg0: i32, %arg1: memref<2xi32, #tpu.memory_space<smem>>, %arg2: memref<2xi32, #tpu.memory_space<smem>>) -> (i32, i32, i32) {
    %c0_i32 = arith.constant 0 : i32
    %c0_i32_0 = arith.constant 0 : i32
    %c0_i32_1 = arith.constant 0 : i32
    return %arg0, %c0_i32, %c0_i32_0 : i32, i32, i32
  }
  func.func @transform_1(%arg0: i32, %arg1: memref<2xi32, #tpu.memory_space<smem>>, %arg2: memref<2xi32, #tpu.memory_space<smem>>) -> (i32, i32, i32) {
    %c0_i32 = arith.constant 0 : i32
    %c0_i32_0 = arith.constant 0 : i32
    %c0_i32_1 = arith.constant 0 : i32
    return %arg0, %c0_i32, %c0_i32_0 : i32, i32, i32
  }
  func.func @transform_2(%arg0: i32, %arg1: memref<2xi32, #tpu.memory_space<smem>>, %arg2: memref<2xi32, #tpu.memory_space<smem>>) -> (i32, i32, i32) {
    %c0_i32 = arith.constant 0 : i32
    %c0_i32_0 = arith.constant 0 : i32
    %c0_i32_1 = arith.constant 0 : i32
    return %arg0, %c0_i32, %c0_i32_0 : i32, i32, i32
  }
}

</mosaic_0001>

<llo_original>
// kernel: tpu_custom_call.1
$region0: #{tpu_custom_call.1}
  #allocation0 [shape = 'u32[]', space=smem, size = 0x4, offset = 0x4, fixed_abs, tag = 'smem constant byte address 0x4 - core index']
  #allocation1 [shape = 'u32[144,128]{1,0:T(1,128)}', space=vmem, size = 0x12000, scoped, tag = 'internal scratch']
  #allocation2 [shape = 'f32[16,128]{1,0:T(8,128)}', space=vmem, size = 0x2000, scoped, tag = 'scratch operand']
  #allocation3 [shape = 's32[1]{0}', space=sflag, size = 0x4, scoped, tag = 'scoped memory for tpu_custom_call.1']
  #allocation4 [shape = 'u8[512]{0}', space=smem, size = 0x200, scoped, tag = 'prefetched SMEM operand 0']
  #allocation5 [shape = 'u8[512]{0}', space=smem, size = 0x200, scoped, tag = 'prefetched SMEM operand 1']
  %s0 = inlined_call_operand.vmem [shape: s32[2], index: 0, kind: input, shape index: {}]
  %s1 = inlined_call_operand.vmem [shape: s32[2], index: 1, kind: input, shape index: {}]
  %s2 = inlined_call_operand.vmem [shape: f32[2,4,128], index: 2, kind: input, shape index: {}]
  %s3 = inlined_call_operand.vmem [shape: f32[2,16,4], index: 3, kind: input, shape index: {}]
  %s4 = inlined_call_operand.hbm [shape: f32[2,16,128], index: 4, kind: output, shape index: {}]
  %s5 = sld [smem:[#allocation0]]
  $region55: #{tpu_custom_call.1} parent=0
    _
  %s7 = ssub.s32 1, %s5
  %s8 = scalar_select 0, %s7, %s5
  %s9 = sshll.u32 %s0, 4
  %s10 = int_to_ptr.vmem [resolvable:$true] %s9
  %12 = dma.vmem_to_smem %s10, 16, [#allocation4], [#allocation3]
  %s13 = sshll.u32 %s1, 4
  %s14 = int_to_ptr.vmem [resolvable:$true] %s13
  %16 = dma.vmem_to_smem %s14, 16, [#allocation5], [#allocation3]
  %17 = dma.done [#allocation3], 32
  %18 = sfence
  $region1: #{tpu_custom_call.1} parent=0
    #allocation6 [shape = 'u8[16384]{0}', space=vmem, size = 0x4000, scoped, tag = 'output window, operand 0']
    #allocation7 [shape = 's32[2]{0}', space=sflag, size = 0x8, scoped, tag = 'scoped memory for tpu_custom_call.1']
    %19 = vsyncpa [#allocation7], 0
    %s20 = scalar_lea.sflag [#allocation7], 1
    %21 = vsyncpa %s20, 0
    loop: start=0, step=1, limit=4
    $region2: #{tpu_custom_call.1} parent=1 // loop_pre_header
      _
    $region3: #{tpu_custom_call.1} parent=1 // loop_header
      %s23 = sphi 0, %s27
      %p24 = scmp.ge.s32.totalorder %s23, 4
      %s33 = sphi 0, %s35
      %s36 = sphi 0, %s33
      %s37 = sphi 0, %s36
      %s53 = sphi 0, %s37
      %s59 = sphi 0, %s61
      %s62 = sphi 0, %s59
      %s63 = sphi 0, %s62
      %s79 = sphi 0, %s63
      %s85 = sphi 0, %s87
      %s88 = sphi 0, %s85
      %s89 = sphi 0, %s88
      %s105 = sphi 0, %s89
    $region4: #{tpu_custom_call.1} parent=1 // loop_header_branch
      %26 = sbr.rel (%p24) target = $region8
    $region5: #{tpu_custom_call.1} parent=1 // loop_body
      %s28 = ssub.s32 %s23, 1
      %s29 = ssub.s32 %s23, 2
      %s30 = sadd.s32 %s23, 1
      %s31 = ssub.s32 %s23, %s30
      %p32 = scmp.eq.s32.totalorder %s31, 0
      %s34 = sadd.s32 %s33, 1
      %s35 = scalar_select %p32, %s33, %s34
      %p38 = pneg %p32
      %p39 = scmp.eq.s32.totalorder %s23, 1
      %p40 = por %p38, %p39
      %p41 = scmp.ne.s32.totalorder %s33, %s36
      %p42 = scmp.eq.s32.totalorder %s23, 0
      %p43 = por %p41, %p42
      %p44 = scmp.ne.s32.totalorder %s33, %s36
      %p45 = scmp.eq.s32.totalorder %s28, 1
      %p46 = por %p44, %p45
      %p47 = scmp.ne.s32.totalorder %s36, %s37
      %p48 = scmp.eq.s32.totalorder %s28, 0
      %p49 = por %p47, %p48
      %p50 = scmp.ne.s32.totalorder %s36, %s37
      %p51 = scmp.eq.s32.totalorder %s29, 1
      %p52 = por %p50, %p51
      %p54 = scmp.ne.s32.totalorder %s37, %s53
      %p55 = scmp.eq.s32.totalorder %s29, 0
      %p56 = por %p54, %p55
      %s57 = ssub.s32 %s23, %s30
      %p58 = scmp.eq.s32.totalorder %s57, 0
      %s60 = sadd.s32 %s59, 1
      %s61 = scalar_select %p58, %s59, %s60
      %p64 = pneg %p58
      %p65 = scmp.eq.s32.totalorder %s23, 1
      %p66 = por %p64, %p65
      %p67 = scmp.ne.s32.totalorder %s59, %s62
      %p68 = scmp.eq.s32.totalorder %s23, 0
      %p69 = por %p67, %p68
      %p70 = scmp.ne.s32.totalorder %s59, %s62
      %p71 = scmp.eq.s32.totalorder %s28, 1
      %p72 = por %p70, %p71
      %p73 = scmp.ne.s32.totalorder %s62, %s63
      %p74 = scmp.eq.s32.totalorder %s28, 0
      %p75 = por %p73, %p74
      %p76 = scmp.ne.s32.totalorder %s62, %s63
      %p77 = scmp.eq.s32.totalorder %s29, 1
      %p78 = por %p76, %p77
      %p80 = scmp.ne.s32.totalorder %s63, %s79
      %p81 = scmp.eq.s32.totalorder %s29, 0
      %p82 = por %p80, %p81
      %s83 = ssub.s32 %s23, %s30
      %p84 = scmp.eq.s32.totalorder %s83, 0
      %s86 = sadd.s32 %s85, 1
      %s87 = scalar_select %p84, %s85, %s86
      %p90 = pneg %p84
      %p91 = scmp.eq.s32.totalorder %s23, 1
      %p92 = por %p90, %p91
      %p93 = scmp.ne.s32.totalorder %s85, %s88
      %p94 = scmp.eq.s32.totalorder %s23, 0
      %p95 = por %p93, %p94
      %p96 = scmp.ne.s32.totalorder %s85, %s88
      %p97 = scmp.eq.s32.totalorder %s28, 1
      %p98 = por %p96, %p97
      %p99 = scmp.ne.s32.totalorder %s88, %s89
      %p100 = scmp.eq.s32.totalorder %s28, 0
      %p101 = por %p99, %p100
      %p102 = scmp.ne.s32.totalorder %s88, %s89
      %p103 = scmp.eq.s32.totalorder %s29, 1
      %p104 = por %p102, %p103
      %p106 = scmp.ne.s32.totalorder %s89, %s105
      %p107 = scmp.eq.s32.totalorder %s29, 0
      %p108 = por %p106, %p107
      %p109 = scmp.le.s32.totalorder 1, %s23
      %p110 = scmp.lt.s32.totalorder %s23, 3
      %p111 = pnand %p109, %p110
      %p112 = pneg %p111
      // Predicated region
      $region9: #{tpu_custom_call.1} parent=5 // pred_check
        _
      $region10: #{tpu_custom_call.1} parent=5 // pred_check_branch
        %114 = sbr.rel (%p111) target = $region12
      $region11: #{tpu_custom_call.1} parent=5 // pred_region
        %s115 = ssub.s32 %s23, 1
      $region12: #{tpu_custom_call.1} parent=5 // pred_fallthru
        _
      %p116 = scmp.lt.s32.totalorder %s23, 2
      // Predicated region
      $region13: #{tpu_custom_call.1} parent=5 // pred_check
        %p117 = pneg %p116
      $region14: #{tpu_custom_call.1} parent=5 // pred_check_branch
        %119 = sbr.rel (%p117) target = $region16
      $region15: #{tpu_custom_call.1} parent=5 // pred_region
        // Predicated region
        $region17: #{tpu_custom_call.1} parent=15 // pred_check
          %p120 = pneg %p43
        $region18: #{tpu_custom_call.1} parent=15 // pred_check_branch
          %122 = sbr.rel (%p120) target = $region20
        $region19: #{tpu_custom_call.1} parent=15 // pred_region
          %p123 = scmp.lt.s32.totalorder %s23, 1
          %s124 = scalar_select %p123, %s23, 1
          %s125 = smul.addr %s124, 4
          %s126 = scalar_lea.vmem %s2, %s125
        $region20: #{tpu_custom_call.1} parent=15 // pred_fallthru
          _
        // Predicated region
        $region21: #{tpu_custom_call.1} parent=15 // pred_check
          %p127 = pneg %p69
        $region22: #{tpu_custom_call.1} parent=15 // pred_check_branch
          %129 = sbr.rel (%p127) target = $region24
        $region23: #{tpu_custom_call.1} parent=15 // pred_region
          %p130 = scmp.lt.s32.totalorder %s23, 1
          %s131 = scalar_select %p130, %s23, 1
          %s132 = smul.addr %s131, 2
          %s133 = smul.addr %s132, 8
          %s134 = scalar_lea.vmem %s3, %s133
        $region24: #{tpu_custom_call.1} parent=15 // pred_fallthru
          _
      $region16: #{tpu_custom_call.1} parent=5 // pred_fallthru
        _
      %p135 = scmp.le.s32.totalorder 1, %s23
      %p136 = scmp.lt.s32.totalorder %s23, 3
      %p137 = pnand %p135, %p136
      %p138 = pneg %p137
      // Predicated region
      $region25: #{tpu_custom_call.1} parent=5 // pred_check
        _
      $region26: #{tpu_custom_call.1} parent=5 // pred_check_branch
        %140 = sbr.rel (%p137) target = $region28
      $region27: #{tpu_custom_call.1} parent=5 // pred_region
        %s141 = ssub.s32 %s23, 1
        %p142 = scmp.lt.s32.totalorder %s28, 1
        %s143 = scalar_select %p142, %s28, 1
        %s144 = smul.addr %s143, 4
        %s145 = scalar_lea.vmem %s2, %s144
        %p146 = pneg %p49
        %p147 = pneg %p46
        %p148 = scmp.lt.s32.totalorder %s28, 1
        %s149 = scalar_select %p148, %s28, 1
        %s150 = smul.addr %s149, 2
        %s151 = smul.addr %s150, 8
        %s152 = scalar_lea.vmem %s3, %s151
        %p153 = pneg %p75
        %p154 = pneg %p72
        %p155 = pneg %p101
        %p156 = pneg %p98
        %s157 = sand.u32 %s88, 1
        %s158 = scalar_lea.sflag [#allocation7], %s157
        %s159 = sand.u32 %s88, 1
        %s160 = smul.addr %s159, 16
        %s161 = scalar_lea.vmem [#allocation6], %s160
        %p162 = scmp.lt.s32.totalorder %s28, 1
        %s163 = scalar_select %p162, %s28, 1
        %s164 = smul.addr %s163, 4
        %s165 = scalar_lea.vmem %s2, %s164
        %p166 = scmp.lt.s32.totalorder %s28, 1
        %s167 = scalar_select %p166, %s28, 1
        %s168 = smul.addr %s167, 2
        %s169 = smul.addr %s168, 8
        %s170 = scalar_lea.vmem %s3, %s169
        %s171 = sld [smem:[#allocation4 + %s28]]
        %s172 = sld [smem:[#allocation5 + %s28]]
        %v173 = vld [vmem:[%s165] sm:$0xf]
        %v174 = vld [vmem:[%s170] sm:$0xff]
        %v175 = vld [vmem:[%s170 + $0x8] sm:$0xff]
        %vm176 = vcmask 31744
        %v178 = vsel %vm176, %v174, 0
        %v181 = vsel %vm176, %v175, 0
        %vm183 = vcmask 1043456
        %v185 = vsel %vm183, %v173, 0
        %187 = vmatprep.subr.mxu0 0.0
        %188 = vmatpush1.msra.mxu0 %v185
        %189 = vmatprep.subr.mxu0 0.0
        %190 = vmatpush1.msra.mxu0 0.0
        %191 = vmatprep.subr.mxu0 0.0
        %192 = vmatpush1.msra.mxu0 0.0
        %193 = vmatprep.subr.mxu0 0.0
        %194 = vmatpush1.msra.mxu0 0.0
        %195 = vmatprep.subr.mxu0 0.0
        %196 = vmatpush1.msra.mxu0 0.0
        %197 = vmatprep.subr.mxu0 0.0
        %198 = vmatpush1.msra.mxu0 0.0
        %199 = vmatprep.subr.mxu0 0.0
        %200 = vmatpush1.msra.mxu0 0.0
        %201 = vmatprep.subr.mxu0 0.0
        %202 = vmatpush1.msra.mxu0 0.0
        %203 = vmatprep.subr.mxu0 0.0
        %204 = vmatpush1.msra.mxu0 0.0
        %205 = vmatprep.subr.mxu0 0.0
        %206 = vmatpush1.msra.mxu0 0.0
        %207 = vmatprep.subr.mxu0 0.0
        %208 = vmatpush1.msra.mxu0 0.0
        %209 = vmatprep.subr.mxu0 0.0
        %210 = vmatpush1.msra.mxu0 0.0
        %211 = vmatprep.subr.mxu0 0.0
        %212 = vmatpush1.msra.mxu0 0.0
        %213 = vmatprep.subr.mxu0 0.0
        %214 = vmatpush1.msra.mxu0 0.0
        %215 = vmatprep.subr.mxu0 0.0
        %216 = vmatpush1.msra.mxu0 0.0
        %217 = vmatprep.subr.mxu0 0.0
        %218 = vmatpush1.msra.mxu0 0.0
        %219 = vmatprep.subr.mxu0 0.0
        %220 = vmatpush1.msra.mxu0 0.0
        %221 = vmatprep.subr.mxu0 0.0
        %222 = vmatpush1.msra.mxu0 0.0
        %223 = vmatprep.subr.mxu0 0.0
        %224 = vmatpush1.msra.mxu0 0.0
        %225 = vmatprep.subr.mxu0 0.0
        %226 = vmatpush1.msra.mxu0 0.0
        %227 = vmatprep.subr.mxu0 0.0
        %228 = vmatpush1.msra.mxu0 0.0
        %229 = vmatprep.subr.mxu0 0.0
        %230 = vmatpush1.msra.mxu0 0.0
        %231 = vmatprep.subr.mxu0 0.0
        %232 = vmatpush1.msra.mxu0 0.0
        %233 = vmatprep.subr.mxu0 0.0
        %234 = vmatpush1.msra.mxu0 0.0
        %235 = vmatprep.subr.mxu0 0.0
        %236 = vmatpush1.msra.mxu0 0.0
        %237 = vmatprep.subr.mxu0 0.0
        %238 = vmatpush1.msra.mxu0 0.0
        %239 = vmatprep.subr.mxu0 0.0
        %240 = vmatpush1.msra.mxu0 0.0
        %241 = vmatprep.subr.mxu0 0.0
        %242 = vmatpush1.msra.mxu0 0.0
        %243 = vmatprep.subr.mxu0 0.0
        %244 = vmatpush1.msra.mxu0 0.0
        %245 = vmatprep.subr.mxu0 0.0
        %246 = vmatpush1.msra.mxu0 0.0
        %247 = vmatprep.subr.mxu0 0.0
        %248 = vmatpush1.msra.mxu0 0.0
        %249 = vmatprep.subr.mxu0 0.0
        %250 = vmatpush1.msra.mxu0 0.0
        %251 = vmatprep.mubr.f32.mxu0 0.0
        %252 = vmatmul.mubr.f32.gmra.mrb[0].mxu0 %v178
        %v253 = vpop.f32.mrb[0].mxu0
        %v254 = vadd.f32 0.0, %v253
        %v255 = vpop.f32.mrb[0].mxu0
        %256 = vmatprep.mubr.f32.mxu0 0.0
        %257 = vmatmul.mubr.f32.gmra.mrb[0].mxu0 %v181
        %v258 = vpop.f32.mrb[0].mxu0
        %v259 = vadd.f32 0.0, %v258
        %v260 = vpop.f32.mrb[0].mxu0
        %261 = vdwg.mxu0
        %v262 = vmul.f32 %v174, %v174
        %v263 = vmul.f32 %v175, %v175
        %v264 = vsel %vm176, %v262, 0.0
        %265 = vadd.xlane.f32.xlu0 %v264
        %v266 = vpop.xlane.xlu0 %265
        %v267 = vsel %vm176, %v263, 0.0
        %268 = vadd.xlane.f32.xlu0 %v267
        %v269 = vpop.xlane.xlu0 %268
        %v270 = vmul.f32 %v173, %v173
        %v271 = vsel %vm183, %v270, 0.0
        %v272 = vrot.slane %v271, 4
        %v273 = vadd.f32 %v271, %v272
        %v274 = vrot.slane %v273, 2
        %v275 = vadd.f32 %v273, %v274
        %v276 = vrot.slane %v275, 1
        %v277 = vadd.f32 %v275, %v276
        %v278 = vmul.f32 %v266, 0.5
        %v279 = vmul.f32 %v269, 0.5
        %v280 = vsub.f32 %v254, %v278
        %v281 = vsub.f32 %v259, %v279
        %v282 = vmul.f32 %v277, 0.5
        %v283 = vsub.f32 %v280, %v282
        %v284 = vsub.f32 %v281, %v282
        %v285 = vadd.f32 %v283, -3.675754
        %v286 = vadd.f32 %v284, -3.675754
        %v287 = vlaneseq
        %v288 = vshrl.u32 %v287, 7
        %v289 = vadd.s32 %v288, 8
        %v290 = vlaneseq
        %v291 = vand.u32 %v290, 127
        %v292 = vstv %s171
        %vm293 = vcmp.lt.s32.totalorder %v291, %v292
        %v294 = vstv %s172
        %vm295 = vcmp.lt.s32.totalorder %v288, %v294
        %vm296 = vcmp.lt.s32.totalorder %v289, %v294
        %vm297 = vmand %vm293, %vm295
        %vm298 = vmand %vm293, %vm296
        %v299 = vsel %vm297, 1, 0
        %v300 = vsel %vm298, 1, 0
        %v301 = vcvt.s32.f32 %v299
        %v302 = vcvt.s32.f32 %v300
        %v303 = vmul.f32 %v285, %v301
        %v304 = vmul.f32 %v286, %v302
        %305 = vst [vmem:[#allocation2] sm:$0xff] %v303
        %306 = vst [vmem:[#allocation2 + $0x8] sm:$0xff] %v304
        %vm307 = vcmp.eq.s32.totalorder %v291, 0
        %vm308 = vcmp.eq.s32.totalorder %v288, 0
        %vm309 = vcmp.eq.s32.totalorder %v288, 1
        %vm310 = vcmp.eq.s32.totalorder %v288, 2
        %vm311 = vcmp.eq.s32.totalorder %v288, 3
        %vm312 = vcmp.eq.s32.totalorder %v288, 4
        %vm313 = vcmp.eq.s32.totalorder %v288, 5
        %vm314 = vcmp.eq.s32.totalorder %v288, 6
        %vm315 = vcmp.eq.s32.totalorder %v288, 7
        loop: start=0, step=1, limit=2
        $region29: #{tpu_custom_call.1} parent=27 // loop_pre_header
          _
        $region30: #{tpu_custom_call.1} parent=27 // loop_header
          %s317 = sphi 0, %s321
          %p318 = scmp.ge.s32.totalorder %s317, 2
          %v322 = vphi 0.0, %v523
        $region31: #{tpu_custom_call.1} parent=27 // loop_header_branch
          %320 = sbr.rel (%p318) target = $region35
        $region32: #{tpu_custom_call.1} parent=27 // loop_body
          %s323 = smul.u32 %s317, 8
          %s324 = scalar_lea.vmem [#allocation2], %s323
          %v325 = vld [vmem:[%s324] sm:$0xff]
          %326 = vrot.lane.b32.xlu0 %v322, 1
          %v327 = vpop.permute.xlu0 %326
          %v328 = vsel %vm307, -1e+30, %v327
          %vm329 = vcmp.ge.f32.partialorder %v322, %v328
          %v330 = vsel %vm329, %v322, %v328
          %p331 = scmp.lt.s32.totalorder %s323, %s172
          %s332 = scalar_select %p331, 1, 0
          %v333 = vstv %s332
          %vm334 = vcmp.eq.s32.totalorder %v333, 1
          %vm335 = vmand %vm293, %vm334
          %v336 = vsel %vm329, 1, 0
          %v337 = vcvt.s32.f32 %v336
          %v338 = vsel %vm335, %v337, 1.0
          %v339 = vlaneseq
          %v340 = vshrl.u32 %v339, 7
          %v341 = vsub.s32 0, %v340
          %v342 = vrot.slane %v338, %v341
          %v343 = vsel %vm308, %v342, 0.0
          %v344 = vstv %s323
          %vm345 = vcmp.le.s32.totalorder %v291, %v344
          %v346 = vadd.f32 %v330, %v325
          %v347 = vsel %vm345, %v346, -1e+30
          %s348 = sadd.s32 %s323, 1
          %349 = vrot.lane.b32.xlu0 %v347, 1
          %v350 = vpop.permute.xlu0 %349
          %v351 = vsel %vm307, -1e+30, %v350
          %vm352 = vcmp.ge.f32.partialorder %v347, %v351
          %v353 = vsel %vm352, %v347, %v351
          %p354 = scmp.lt.s32.totalorder %s348, %s172
          %s355 = scalar_select %p354, 1, 0
          %v356 = vstv %s355
          %vm357 = vcmp.eq.s32.totalorder %v356, 1
          %vm358 = vmand %vm293, %vm357
          %v359 = vsel %vm352, 1, 0
          %v360 = vcvt.s32.f32 %v359
          %v361 = vsel %vm358, %v360, 1.0
          %v362 = vlaneseq
          %v363 = vshrl.u32 %v362, 7
          %v364 = vsub.s32 0, %v363
          %v365 = vrot.slane %v361, %v364
          %v366 = vsel %vm309, %v365, %v343
          %v367 = vstv %s348
          %vm368 = vcmp.le.s32.totalorder %v291, %v367
          %v370 = vrot.slane %v325, 1
          %v372 = vadd.f32 %v353, %v370
          %v373 = vsel %vm368, %v372, -1e+30
          %s374 = sadd.s32 %s323, 2
          %375 = vrot.lane.b32.xlu0 %v373, 1
          %v376 = vpop.permute.xlu0 %375
          %v377 = vsel %vm307, -1e+30, %v376
          %vm378 = vcmp.ge.f32.partialorder %v373, %v377
          %v379 = vsel %vm378, %v373, %v377
          %p380 = scmp.lt.s32.totalorder %s374, %s172
          %s381 = scalar_select %p380, 1, 0
          %v382 = vstv %s381
          %vm383 = vcmp.eq.s32.totalorder %v382, 1
          %vm384 = vmand %vm293, %vm383
          %v385 = vsel %vm378, 1, 0
          %v386 = vcvt.s32.f32 %v385
          %v387 = vsel %vm384, %v386, 1.0
          %v388 = vlaneseq
          %v389 = vshrl.u32 %v388, 7
          %v390 = vsub.s32 0, %v389
          %v391 = vrot.slane %v387, %v390
          %v392 = vsel %vm310, %v391, %v366
          %v393 = vstv %s374
          %vm394 = vcmp.le.s32.totalorder %v291, %v393
          %v395 = vrot.slane %v325, 2
          %v397 = vadd.f32 %v379, %v395
          %v398 = vsel %vm394, %v397, -1e+30
          %s399 = sadd.s32 %s323, 3
          %400 = vrot.lane.b32.xlu0 %v398, 1
          %v401 = vpop.permute.xlu0 %400
          %v402 = vsel %vm307, -1e+30, %v401
          %vm403 = vcmp.ge.f32.partialorder %v398, %v402
          %v404 = vsel %vm403, %v398, %v402
          %p405 = scmp.lt.s32.totalorder %s399, %s172
          %s406 = scalar_select %p405, 1, 0
          %v407 = vstv %s406
          %vm408 = vcmp.eq.s32.totalorder %v407, 1
          %vm409 = vmand %vm293, %vm408
          %v410 = vsel %vm403, 1, 0
          %v411 = vcvt.s32.f32 %v410
          %v412 = vsel %vm409, %v411, 1.0
          %v413 = vlaneseq
          %v414 = vshrl.u32 %v413, 7
          %v415 = vsub.s32 0, %v414
          %v416 = vrot.slane %v412, %v415
          %v417 = vsel %vm311, %v416, %v392
          %v418 = vstv %s399
          %vm419 = vcmp.le.s32.totalorder %v291, %v418
          %v420 = vrot.slane %v325, 3
          %v422 = vadd.f32 %v404, %v420
          %v423 = vsel %vm419, %v422, -1e+30
          %s424 = sadd.s32 %s323, 4
          %425 = vrot.lane.b32.xlu0 %v423, 1
          %v426 = vpop.permute.xlu0 %425
          %v427 = vsel %vm307, -1e+30, %v426
          %vm428 = vcmp.ge.f32.partialorder %v423, %v427
          %v429 = vsel %vm428, %v423, %v427
          %p430 = scmp.lt.s32.totalorder %s424, %s172
          %s431 = scalar_select %p430, 1, 0
          %v432 = vstv %s431
          %vm433 = vcmp.eq.s32.totalorder %v432, 1
          %vm434 = vmand %vm293, %vm433
          %v435 = vsel %vm428, 1, 0
          %v436 = vcvt.s32.f32 %v435
          %v437 = vsel %vm434, %v436, 1.0
          %v438 = vlaneseq
          %v439 = vshrl.u32 %v438, 7
          %v440 = vsub.s32 0, %v439
          %v441 = vrot.slane %v437, %v440
          %v442 = vsel %vm312, %v441, %v417
          %v443 = vstv %s424
          %vm444 = vcmp.le.s32.totalorder %v291, %v443
          %v445 = vrot.slane %v325, 4
          %v447 = vadd.f32 %v429, %v445
          %v448 = vsel %vm444, %v447, -1e+30
          %s449 = sadd.s32 %s323, 5
          %450 = vrot.lane.b32.xlu0 %v448, 1
          %v451 = vpop.permute.xlu0 %450
          %v452 = vsel %vm307, -1e+30, %v451
          %vm453 = vcmp.ge.f32.partialorder %v448, %v452
          %v454 = vsel %vm453, %v448, %v452
          %p455 = scmp.lt.s32.totalorder %s449, %s172
          %s456 = scalar_select %p455, 1, 0
          %v457 = vstv %s456
          %vm458 = vcmp.eq.s32.totalorder %v457, 1
          %vm459 = vmand %vm293, %vm458
          %v460 = vsel %vm453, 1, 0
          %v461 = vcvt.s32.f32 %v460
          %v462 = vsel %vm459, %v461, 1.0
          %v463 = vlaneseq
          %v464 = vshrl.u32 %v463, 7
          %v465 = vsub.s32 0, %v464
          %v466 = vrot.slane %v462, %v465
          %v467 = vsel %vm313, %v466, %v442
          %v468 = vstv %s449
          %vm469 = vcmp.le.s32.totalorder %v291, %v468
          %v470 = vrot.slane %v325, 5
          %v472 = vadd.f32 %v454, %v470
          %v473 = vsel %vm469, %v472, -1e+30
          %s474 = sadd.s32 %s323, 6
          %475 = vrot.lane.b32.xlu0 %v473, 1
          %v476 = vpop.permute.xlu0 %475
          %v477 = vsel %vm307, -1e+30, %v476
          %vm478 = vcmp.ge.f32.partialorder %v473, %v477
          %v479 = vsel %vm478, %v473, %v477
          %p480 = scmp.lt.s32.totalorder %s474, %s172
          %s481 = scalar_select %p480, 1, 0
          %v482 = vstv %s481
          %vm483 = vcmp.eq.s32.totalorder %v482, 1
          %vm484 = vmand %vm293, %vm483
          %v485 = vsel %vm478, 1, 0
          %v486 = vcvt.s32.f32 %v485
          %v487 = vsel %vm484, %v486, 1.0
          %v488 = vlaneseq
          %v489 = vshrl.u32 %v488, 7
          %v490 = vsub.s32 0, %v489
          %v491 = vrot.slane %v487, %v490
          %v492 = vsel %vm314, %v491, %v467
          %v493 = vstv %s474
          %vm494 = vcmp.le.s32.totalorder %v291, %v493
          %v495 = vrot.slane %v325, 6
          %v497 = vadd.f32 %v479, %v495
          %v498 = vsel %vm494, %v497, -1e+30
          %s499 = sadd.s32 %s323, 7
          %500 = vrot.lane.b32.xlu0 %v498, 1
          %v501 = vpop.permute.xlu0 %500
          %v502 = vsel %vm307, -1e+30, %v501
          %vm503 = vcmp.ge.f32.partialorder %v498, %v502
          %v504 = vsel %vm503, %v498, %v502
          %p505 = scmp.lt.s32.totalorder %s499, %s172
          %s506 = scalar_select %p505, 1, 0
          %v507 = vstv %s506
          %vm508 = vcmp.eq.s32.totalorder %v507, 1
          %vm509 = vmand %vm293, %vm508
          %v510 = vsel %vm503, 1, 0
          %v511 = vcvt.s32.f32 %v510
          %v512 = vsel %vm509, %v511, 1.0
          %v513 = vlaneseq
          %v514 = vshrl.u32 %v513, 7
          %v515 = vsub.s32 0, %v514
          %v516 = vrot.slane %v512, %v515
          %v517 = vsel %vm315, %v516, %v492
          %v518 = vstv %s499
          %vm519 = vcmp.le.s32.totalorder %v291, %v518
          %v520 = vrot.slane %v325, 7
          %v522 = vadd.f32 %v504, %v520
          %v523 = vsel %vm519, %v522, -1e+30
          %524 = vst [vmem:[%s324] sm:$0xff] %v517
        $region33: #{tpu_custom_call.1} parent=27 // loop_footer
          %s321 = sadd.s32 1, %s317
        $region34: #{tpu_custom_call.1} parent=27 // loop_footer_branch
          %316 = sbr.rel target = $region30
        $region35: #{tpu_custom_call.1} parent=27 // loop_exit
          _
        %s525 = ssub.s32 %s171, 1
        %v526 = vstv %s525
        %vm527 = vcmp.eq.s32.totalorder %v291, %v526
        %v528 = vsel %vm527, 1, 0
        %v529 = vcvt.s32.f32 %v528
        loop: start=0, step=1, limit=2
        $region36: #{tpu_custom_call.1} parent=27 // loop_pre_header
          _
        $region37: #{tpu_custom_call.1} parent=27 // loop_header
          %s531 = sphi 0, %s535
          %p532 = scmp.ge.s32.totalorder %s531, 2
          %v536 = vphi %v529, %v746
        $region38: #{tpu_custom_call.1} parent=27 // loop_header_branch
          %534 = sbr.rel (%p532) target = $region42
        $region39: #{tpu_custom_call.1} parent=27 // loop_body
          %s537 = ssub.s32 1, %s531
          %s538 = smul.u32 %s537, 8
          %s539 = scalar_lea.vmem [#allocation2], %s538
          %v540 = vld [vmem:[%s539] sm:$0xff]
          %s541 = sadd.s32 %s538, 7
          %p542 = scmp.lt.s32.totalorder %s541, %s172
          %s543 = scalar_select %p542, 1, 0
          %v544 = vstv %s543
          %vm545 = vcmp.eq.s32.totalorder %v544, 1
          %v546 = vsel %vm545, %v536, 0.0
          %v547 = vlaneseq
          %v548 = vshrl.u32 %v547, 7
          %v549 = vsub.s32 7, %v548
          %v550 = vrot.slane %v546, %v549
          %v551 = vsel %vm315, %v550, 0.0
          %v552 = vsub.f32 1.0, %v540
          %v553 = vmul.f32 %v536, %v552
          %v554 = vmul.f32 %v536, %v540
          %v556 = vrot.slane %v553, 7
          %558 = vrot.lane.b32.xlu0 %v556, 127
          %v559 = vpop.permute.xlu0 %558
          %v561 = vrot.slane %v559, 1
          %v563 = vadd.f32 %v554, %v561
          %s564 = sadd.s32 %s538, 6
          %p565 = scmp.lt.s32.totalorder %s564, %s172
          %s566 = scalar_select %p565, 1, 0
          %v567 = vstv %s566
          %vm568 = vcmp.eq.s32.totalorder %v567, 1
          %v569 = vsel %vm568, %v563, 0.0
          %v570 = vlaneseq
          %v571 = vshrl.u32 %v570, 7
          %v572 = vsub.s32 7, %v571
          %v573 = vrot.slane %v569, %v572
          %v574 = vsel %vm314, %v573, %v551
          %v576 = vrot.slane %v552, 7
          %v578 = vmul.f32 %v563, %v576
          %v580 = vrot.slane %v540, 7
          %v582 = vmul.f32 %v563, %v580
          %v584 = vrot.slane %v578, 7
          %586 = vrot.lane.b32.xlu0 %v584, 127
          %v587 = vpop.permute.xlu0 %586
          %v589 = vrot.slane %v587, 1
          %v591 = vadd.f32 %v582, %v589
          %s592 = sadd.s32 %s538, 5
          %p593 = scmp.lt.s32.totalorder %s592, %s172
          %s594 = scalar_select %p593, 1, 0
          %v595 = vstv %s594
          %vm596 = vcmp.eq.s32.totalorder %v595, 1
          %v597 = vsel %vm596, %v591, 0.0
          %v598 = vlaneseq
          %v599 = vshrl.u32 %v598, 7
          %v600 = vsub.s32 7, %v599
          %v601 = vrot.slane %v597, %v600
          %v602 = vsel %vm313, %v601, %v574
          %v603 = vrot.slane %v552, 6
          %v605 = vmul.f32 %v591, %v603
          %v606 = vrot.slane %v540, 6
          %v608 = vmul.f32 %v591, %v606
          %v610 = vrot.slane %v605, 7
          %612 = vrot.lane.b32.xlu0 %v610, 127
          %v613 = vpop.permute.xlu0 %612
          %v615 = vrot.slane %v613, 1
          %v617 = vadd.f32 %v608, %v615
          %s618 = sadd.s32 %s538, 4
          %p619 = scmp.lt.s32.totalorder %s618, %s172
          %s620 = scalar_select %p619, 1, 0
          %v621 = vstv %s620
          %vm622 = vcmp.eq.s32.totalorder %v621, 1
          %v623 = vsel %vm622, %v617, 0.0
          %v624 = vlaneseq
          %v625 = vshrl.u32 %v624, 7
          %v626 = vsub.s32 7, %v625
          %v627 = vrot.slane %v623, %v626
          %v628 = vsel %vm312, %v627, %v602
          %v629 = vrot.slane %v552, 5
          %v631 = vmul.f32 %v617, %v629
          %v632 = vrot.slane %v540, 5
          %v634 = vmul.f32 %v617, %v632
          %v636 = vrot.slane %v631, 7
          %638 = vrot.lane.b32.xlu0 %v636, 127
          %v639 = vpop.permute.xlu0 %638
          %v641 = vrot.slane %v639, 1
          %v643 = vadd.f32 %v634, %v641
          %s644 = sadd.s32 %s538, 3
          %p645 = scmp.lt.s32.totalorder %s644, %s172
          %s646 = scalar_select %p645, 1, 0
          %v647 = vstv %s646
          %vm648 = vcmp.eq.s32.totalorder %v647, 1
          %v649 = vsel %vm648, %v643, 0.0
          %v650 = vlaneseq
          %v651 = vshrl.u32 %v650, 7
          %v652 = vsub.s32 7, %v651
          %v653 = vrot.slane %v649, %v652
          %v654 = vsel %vm311, %v653, %v628
          %v655 = vrot.slane %v552, 4
          %v657 = vmul.f32 %v643, %v655
          %v658 = vrot.slane %v540, 4
          %v660 = vmul.f32 %v643, %v658
          %v662 = vrot.slane %v657, 7
          %664 = vrot.lane.b32.xlu0 %v662, 127
          %v665 = vpop.permute.xlu0 %664
          %v667 = vrot.slane %v665, 1
          %v669 = vadd.f32 %v660, %v667
          %s670 = sadd.s32 %s538, 2
          %p671 = scmp.lt.s32.totalorder %s670, %s172
          %s672 = scalar_select %p671, 1, 0
          %v673 = vstv %s672
          %vm674 = vcmp.eq.s32.totalorder %v673, 1
          %v675 = vsel %vm674, %v669, 0.0
          %v676 = vlaneseq
          %v677 = vshrl.u32 %v676, 7
          %v678 = vsub.s32 7, %v677
          %v679 = vrot.slane %v675, %v678
          %v680 = vsel %vm310, %v679, %v654
          %v681 = vrot.slane %v552, 3
          %v683 = vmul.f32 %v669, %v681
          %v684 = vrot.slane %v540, 3
          %v686 = vmul.f32 %v669, %v684
          %v688 = vrot.slane %v683, 7
          %690 = vrot.lane.b32.xlu0 %v688, 127
          %v691 = vpop.permute.xlu0 %690
          %v693 = vrot.slane %v691, 1
          %v695 = vadd.f32 %v686, %v693
          %s696 = sadd.s32 %s538, 1
          %p697 = scmp.lt.s32.totalorder %s696, %s172
          %s698 = scalar_select %p697, 1, 0
          %v699 = vstv %s698
          %vm700 = vcmp.eq.s32.totalorder %v699, 1
          %v701 = vsel %vm700, %v695, 0.0
          %v702 = vlaneseq
          %v703 = vshrl.u32 %v702, 7
          %v704 = vsub.s32 7, %v703
          %v705 = vrot.slane %v701, %v704
          %v706 = vsel %vm309, %v705, %v680
          %v707 = vrot.slane %v552, 2
          %v709 = vmul.f32 %v695, %v707
          %v710 = vrot.slane %v540, 2
          %v712 = vmul.f32 %v695, %v710
          %v714 = vrot.slane %v709, 7
          %716 = vrot.lane.b32.xlu0 %v714, 127
          %v717 = vpop.permute.xlu0 %716
          %v719 = vrot.slane %v717, 1
          %v721 = vadd.f32 %v712, %v719
          %p722 = scmp.lt.s32.totalorder %s538, %s172
          %s723 = scalar_select %p722, 1, 0
          %v724 = vstv %s723
          %vm725 = vcmp.eq.s32.totalorder %v724, 1
          %v726 = vsel %vm725, %v721, 0.0
          %v727 = vlaneseq
          %v728 = vshrl.u32 %v727, 7
          %v729 = vsub.s32 7, %v728
          %v730 = vrot.slane %v726, %v729
          %v731 = vsel %vm308, %v730, %v706
          %v732 = vrot.slane %v552, 1
          %v734 = vmul.f32 %v721, %v732
          %v735 = vrot.slane %v540, 1
          %v737 = vmul.f32 %v721, %v735
          %v739 = vrot.slane %v734, 7
          %741 = vrot.lane.b32.xlu0 %v739, 127
          %v742 = vpop.permute.xlu0 %741
          %v744 = vrot.slane %v742, 1
          %v746 = vadd.f32 %v737, %v744
          %s747 = scalar_lea.vmem %s161, %s538 [#allocation6]
          %748 = vst [vmem:[%s747] sm:$0xff] %v731
        $region40: #{tpu_custom_call.1} parent=27 // loop_footer
          %s535 = sadd.s32 1, %s531
        $region41: #{tpu_custom_call.1} parent=27 // loop_footer_branch
          %530 = sbr.rel target = $region37
        $region42: #{tpu_custom_call.1} parent=27 // loop_exit
          _
        %s749 = sand.u32 %s88, 1
        %s750 = scalar_lea.sflag [#allocation7], %s749
        %s751 = sand.u32 %s88, 1
        %s752 = smul.addr %s751, 16
        %s753 = scalar_lea.vmem [#allocation6], %s752
        // Predicated region
        $region43: #{tpu_custom_call.1} parent=27 // pred_check
          %p754 = pneg %p98
        $region44: #{tpu_custom_call.1} parent=27 // pred_check_branch
          %756 = sbr.rel (%p754) target = $region46
        $region45: #{tpu_custom_call.1} parent=27 // pred_region
          %s758 = ssub.s32 256, 256
          %759 = vsyncadd %s750, %s758
          %s760 = smul.addr %s28, 2
          %s761 = smul.addr %s760, 128
          %s762 = scalar_lea.hbm %s4, %s761
          %s763 = sshll.u32 %s753, 4
          %s764 = int_to_ptr.vmem [resolvable:$true] %s763
          %769 = dma.vmem_to_hbm [thread:$0]  %s764, 256, %s762, %s750, 128, 128, 8
        $region46: #{tpu_custom_call.1} parent=27 // pred_fallthru
          _
      $region28: #{tpu_custom_call.1} parent=5 // pred_fallthru
        _
      %p770 = scmp.le.s32.totalorder 2, %s23
      // Predicated region
      $region47: #{tpu_custom_call.1} parent=5 // pred_check
        %p771 = pneg %p770
      $region48: #{tpu_custom_call.1} parent=5 // pred_check_branch
        %773 = sbr.rel (%p771) target = $region50
      $region49: #{tpu_custom_call.1} parent=5 // pred_region
        %s774 = ssub.s32 %s23, 2
        // Predicated region
        $region51: #{tpu_custom_call.1} parent=49 // pred_check
          %p775 = pneg %p104
        $region52: #{tpu_custom_call.1} parent=49 // pred_check_branch
          %777 = sbr.rel (%p775) target = $region54
        $region53: #{tpu_custom_call.1} parent=49 // pred_region
          %s778 = sand.u32 %s89, 1
          %s779 = scalar_lea.sflag [#allocation7], %s778
          %s780 = sand.u32 %s89, 1
          %s781 = smul.addr %s780, 16
          %s782 = scalar_lea.vmem [#allocation6], %s781
          %783 = dma.done %s779, 256
        $region54: #{tpu_custom_call.1} parent=49 // pred_fallthru
          _
      $region50: #{tpu_custom_call.1} parent=5 // pred_fallthru
        _
    $region6: #{tpu_custom_call.1} parent=1 // loop_footer
      %s27 = sadd.s32 1, %s23
    $region7: #{tpu_custom_call.1} parent=1 // loop_footer_branch
      %22 = sbr.rel target = $region3
    $region8: #{tpu_custom_call.1} parent=1 // loop_exit
      _
    %784 = vsyncpa [#allocation7], 1
    %s785 = scalar_lea.sflag [#allocation7], 1
    %786 = vsyncpa %s785, 1

</llo_original>
